<compile_context>
chip_gen: v7x
topology: tpu7x:2x2x1
jax: 0.10.0
libtpu: 0.0.40
codegen_flags: <defaults>
</compile_context>

<pallas_src>
import functools

import jax
import jax.numpy as jnp
from jax.experimental import pallas as pl
from jax.experimental.pallas import tpu as pltpu


def _dice_kernel(x_ref, t_ref, o_ref, acc_ref, *, smooth, square, h_total,
                 need_mask):
    """Accumulating reduction over (th, W) tiles of channel-1 preds / targets.

    acc_ref (VMEM, (2, th, W) f32):
      acc[0] accumulates x * t
      acc[1] accumulates x + t            (square=False)
             accumulates x*x + t*t        (square=True)
    The single cross-lane reduce + dice combination runs only on the last step.
    """
    n = pl.program_id(0)
    h = pl.program_id(1)
    is_first = jnp.logical_and(n == 0, h == 0)
    is_last = jnp.logical_and(n == pl.num_programs(0) - 1,
                              h == pl.num_programs(1) - 1)

    @pl.when(is_first)
    def _init():
        acc_ref[...] = jnp.zeros_like(acc_ref)

    # Blocks are (1, 1, th, W) and (1, th, W); drop the leading unit dims.
    # Cast on load (inputs stream in their native dtype).
    x = x_ref[0, 0].astype(jnp.float32)   # (th, W)
    t = t_ref[0].astype(jnp.float32)      # (th, W)

    if need_mask:
        # Last H-tile may extend past H; zero out the out-of-bounds rows.
        th = x.shape[0]
        valid = h_total - h * th
        row = jax.lax.broadcasted_iota(jnp.int32, x.shape, 0)
        keep = row < valid
        x = jnp.where(keep, x, 0.0)
        t = jnp.where(keep, t, 0.0)

    # PyTorch ordering: `mult` uses the un-squared values; squaring (if any)
    # only affects the denominator sums.
    acc_ref[0] += x * t
    if square:
        acc_ref[1] += x * x + t * t
    else:
        acc_ref[1] += x + t

    @pl.when(is_last)
    def _finalize():
        mult = jnp.sum(acc_ref[0])
        denom = jnp.sum(acc_ref[1]) + smooth
        o_ref[0] = 1.0 - (2.0 * mult + smooth) / denom


def dice_loss(predictions, targets, smooth=1.0, square=False, *,
              channel=1, max_block_elems=256 * 1024):
    """Pallas equivalent of DL(smooth, square).forward(predictions, targets).

    predictions: (N, C, H, W), any float dtype.
    targets:     (N, H, W).
    """
    N, C, H, W = predictions.shape
    assert C > channel, "predictions must have a channel-1 slice"
    assert targets.shape == (N, H, W), "targets must be (N, H, W)"

    # H-tile: full H if the (H, W) slab is small enough (<= ~1 MiB f32),
    # otherwise a multiple-of-8 row count targeting ~max_block_elems elements.
    if H * W <= max_block_elems:
        th = H
    else:
        th = max(8, (max_block_elems // W) // 8 * 8)
        th = min(th, H)
    nh = pl.cdiv(H, th)
    need_mask = (H % th) != 0

    kernel = functools.partial(
        _dice_kernel,
        smooth=float(smooth),
        square=bool(square),
        h_total=H,
        need_mask=need_mask,
    )

    out = pl.pallas_call(
        kernel,
        out_shape=jax.ShapeDtypeStruct((1,), jnp.float32),
        grid_spec=pltpu.PrefetchScalarGridSpec(
            num_scalar_prefetch=0,
            grid=(N, nh),
            in_specs=[
                # Channel slice expressed via the index_map: C block pinned.
                pl.BlockSpec((1, 1, th, W), lambda n, h: (n, channel, h, 0)),
                pl.BlockSpec((1, th, W), lambda n, h: (n, h, 0)),
            ],
            out_specs=pl.BlockSpec(memory_space=pltpu.MemorySpace.SMEM),
            scratch_shapes=[pltpu.VMEM((2, th, W), jnp.float32)],
        ),
        compiler_params=pltpu.CompilerParams(
            # Both grid axes feed the shared accumulator -> reduction axes.
            dimension_semantics=("arbitrary", "arbitrary"),
        ),
    )(predictions, targets)
    return out[0]


def _reference(predictions, targets, smooth=1.0, square=False):
    """Pure-JAX reference replicating the PyTorch forward exactly."""
    input_flat = predictions[:, 1].astype(jnp.float32).reshape(-1)
    target_flat = targets.astype(jnp.float32).reshape(-1)
    mult = jnp.sum(input_flat * target_flat)
    if square:
        input_flat = input_flat * input_flat
        target_flat = target_flat * target_flat
    dice = (2.0 * mult + smooth) / (jnp.sum(input_flat) + jnp.sum(target_flat) + smooth)
    return 1.0 - dice


if __name__ == "__main__":
    key = jax.random.PRNGKey(0)
    k1, k2, k3, k4 = jax.random.split(key, 4)

    # Small shapes consistent with the forward: NCHW predictions, (N,H,W) targets.
    N, C, H, W = 2, 4, 16, 16
    predictions = jax.nn.softmax(
        jax.random.normal(k1, (N, C, H, W), dtype=jnp.float32), axis=1)
    targets = (jax.random.uniform(k2, (N, H, W)) > 0.5).astype(jnp.float32)

    for square in (False, True):
        out = jax.block_until_ready(
            dice_loss(predictions, targets, smooth=1.0, square=square))
        ref = _reference(predictions, targets, smooth=1.0, square=square)
        assert jnp.allclose(out, ref, rtol=1e-5, atol=1e-6), (square, out, ref)

    # Native bf16 predictions: kernel casts on load (no host-side upcast copy).
    pred_bf16 = predictions.astype(jnp.bfloat16)
    out = jax.block_until_ready(dice_loss(pred_bf16, targets))
    ref = _reference(pred_bf16, targets)
    assert jnp.allclose(out, ref, rtol=2e-2, atol=2e-2), (out, ref)

    # Ragged H-tiling path: force tiny tiles so H % th != 0 and the in-kernel
    # row mask is exercised (th=8 over H=20).
    N2, C2, H2, W2 = 2, 4, 20, 24
    p2 = jax.nn.softmax(
        jax.random.normal(k3, (N2, C2, H2, W2), dtype=jnp.float32), axis=1)
    t2 = (jax.random.uniform(k4, (N2, H2, W2)) > 0.5).astype(jnp.float32)
    out = jax.block_until_ready(
        dice_loss(p2, t2, smooth=1.0, square=True, max_block_elems=8 * W2))
    ref = _reference(p2, t2, smooth=1.0, square=True)
    assert jnp.allclose(out, ref, rtol=1e-5, atol=1e-6), (out, ref)

    print("KERNEL_OK")
</pallas_src>

<mosaic_0001>
module attributes {stable_mosaic.version = 11 : i64} {
  func.func @_dice_kernel(%arg0: i32, %arg1: i32, %arg2: memref<1x1x16x16xf32, #tpu.memory_space<vmem>>, %arg3: memref<1x16x16xf32, #tpu.memory_space<vmem>>, %arg4: memref<1xf32, #tpu.memory_space<smem>>, %arg5: memref<2x16x16xf32, #tpu.memory_space<vmem>>) attributes {dimension_semantics = [#tpu.dimension_semantics<arbitrary>, #tpu.dimension_semantics<arbitrary>], iteration_bounds = array<i64: 2, 1>, scalar_prefetch = 0 : i64, scratch_operands = 1 : i64, tpu.core_type = #tpu.core_type<tc>, window_params = [{transform_indices = @transform_0, window_bounds = array<i64: 1, 1, 16, 16>}, {transform_indices = @transform_1, window_bounds = array<i64: 1, 16, 16>}, {transform_indices = @transform_2, window_bounds = array<i64: 1>}]} {
    %c0_i32 = arith.constant 0 : i32
    %0 = arith.cmpi eq, %arg0, %c0_i32 : i32
    %c0_i32_0 = arith.constant 0 : i32
    %1 = arith.cmpi eq, %arg1, %c0_i32_0 : i32
    %2 = arith.andi %0, %1 : i1
    %c1_i32 = arith.constant 1 : i32
    %3 = arith.cmpi eq, %arg0, %c1_i32 : i32
    %c0_i32_1 = arith.constant 0 : i32
    %4 = arith.cmpi eq, %arg1, %c0_i32_1 : i32
    %5 = arith.andi %3, %4 : i1
    %6 = arith.extui %2 : i1 to i32
    %c0_i32_2 = arith.constant 0 : i32
    %7 = arith.cmpi ne, %6, %c0_i32_2 : i32
    scf.if %7 {
      %cst = arith.constant 0.000000e+00 : f32
      %28 = vector.broadcast %cst : f32 to vector<2x16x16xf32>
      %c0_21 = arith.constant 0 : index
      %c0_22 = arith.constant 0 : index
      %c0_23 = arith.constant 0 : index
      %29 = vector.load %arg5[%c0_21, %c0_22, %c0_23] : memref<2x16x16xf32, #tpu.memory_space<vmem>>, vector<2x16x16xf32>
      tpu.vector_store %arg5[%c0_21, %c0_22, %c0_23], %28 {strides = array<i32>} : memref<2x16x16xf32, #tpu.memory_space<vmem>>, vector<2x16x16xf32>,
    } else {
    }
    %c0 = arith.constant 0 : index
    %c0_3 = arith.constant 0 : index
    %c0_4 = arith.constant 0 : index
    %c0_5 = arith.constant 0 : index
    %8 = vector.load %arg2[%c0, %c0_3, %c0_4, %c0_5] : memref<1x1x16x16xf32, #tpu.memory_space<vmem>>, vector<1x1x16x16xf32>
    %9 = vector.shape_cast %8 : vector<1x1x16x16xf32> to vector<16x16xf32>
    %c0_6 = arith.constant 0 : index
    %c0_7 = arith.constant 0 : index
    %c0_8 = arith.constant 0 : index
    %10 = vector.load %arg3[%c0_6, %c0_7, %c0_8] : memref<1x16x16xf32, #tpu.memory_space<vmem>>, vector<1x16x16xf32>
    %11 = vector.shape_cast %10 : vector<1x16x16xf32> to vector<16x16xf32>
    %c0_9 = arith.constant 0 : index
    %c0_10 = arith.constant 0 : index
    %c0_11 = arith.constant 0 : index
    %12 = vector.load %arg5[%c0_9, %c0_10, %c0_11] : memref<2x16x16xf32, #tpu.memory_space<vmem>>, vector<1x16x16xf32>
    %13 = vector.shape_cast %12 : vector<1x16x16xf32> to vector<16x16xf32>
    %14 = arith.mulf %9, %11 : vector<16x16xf32>
    %15 = arith.addf %13, %14 : vector<16x16xf32>
    %c0_12 = arith.constant 0 : index
    %c0_13 = arith.constant 0 : index
    %c0_14 = arith.constant 0 : index
    %16 = vector.load %arg5[%c0_12, %c0_13, %c0_14] : memref<2x16x16xf32, #tpu.memory_space<vmem>>, vector<1x16x16xf32>
    %17 = vector.shape_cast %16 : vector<1x16x16xf32> to vector<16x16xf32>
    %18 = vector.shape_cast %15 : vector<16x16xf32> to vector<1x16x16xf32>
    tpu.vector_store %arg5[%c0_12, %c0_13, %c0_14], %18 {strides = array<i32>} : memref<2x16x16xf32, #tpu.memory_space<vmem>>, vector<1x16x16xf32>,
    %c1 = arith.constant 1 : index
    %c0_15 = arith.constant 0 : index
    %c0_16 = arith.constant 0 : index
    %19 = vector.load %arg5[%c1, %c0_15, %c0_16] : memref<2x16x16xf32, #tpu.memory_space<vmem>>, vector<1x16x16xf32>
    %20 = vector.shape_cast %19 : vector<1x16x16xf32> to vector<16x16xf32>
    %21 = arith.addf %9, %11 : vector<16x16xf32>
    %22 = arith.addf %20, %21 : vector<16x16xf32>
    %c1_17 = arith.constant 1 : index
    %c0_18 = arith.constant 0 : index
    %c0_19 = arith.constant 0 : index
    %23 = vector.load %arg5[%c1_17, %c0_18, %c0_19] : memref<2x16x16xf32, #tpu.memory_space<vmem>>, vector<1x16x16xf32>
    %24 = vector.shape_cast %23 : vector<1x16x16xf32> to vector<16x16xf32>
    %25 = vector.shape_cast %22 : vector<16x16xf32> to vector<1x16x16xf32>
    tpu.vector_store %arg5[%c1_17, %c0_18, %c0_19], %25 {strides = array<i32>} : memref<2x16x16xf32, #tpu.memory_space<vmem>>, vector<1x16x16xf32>,
    %26 = arith.extui %5 : i1 to i32
    %c0_i32_20 = arith.constant 0 : i32
    %27 = arith.cmpi ne, %26, %c0_i32_20 : i32
    scf.if %27 {
      %c0_21 = arith.constant 0 : index
      %c0_22 = arith.constant 0 : index
      %c0_23 = arith.constant 0 : index
      %28 = vector.load %arg5[%c0_21, %c0_22, %c0_23] : memref<2x16x16xf32, #tpu.memory_space<vmem>>, vector<1x16x16xf32>
      %29 = vector.shape_cast %28 : vector<1x16x16xf32> to vector<16x16xf32>
      %30 = vector.shape_cast %29 : vector<16x16xf32> to vector<1x16x16xf32>
      %cst = arith.constant dense<0.000000e+00> : vector<1xf32>
      %31 = vector.multi_reduction <add>, %30, %cst [1, 2] : vector<1x16x16xf32> to vector<1xf32>
      %32 = vector.shape_cast %31 : vector<1xf32> to vector<1x1x1xf32>
      %33 = vector.extract %32[0, 0, 0] : f32 from vector<1x1x1xf32>
      %c1_24 = arith.constant 1 : index
      %c0_25 = arith.constant 0 : index
      %c0_26 = arith.constant 0 : index
      %34 = vector.load %arg5[%c1_24, %c0_25, %c0_26] : memref<2x16x16xf32, #tpu.memory_space<vmem>>, vector<1x16x16xf32>
      %35 = vector.shape_cast %34 : vector<1x16x16xf32> to vector<16x16xf32>
      %36 = vector.shape_cast %35 : vector<16x16xf32> to vector<1x16x16xf32>
      %cst_27 = arith.constant dense<0.000000e+00> : vector<1xf32>
      %37 = vector.multi_reduction <add>, %36, %cst_27 [1, 2] : vector<1x16x16xf32> to vector<1xf32>
      %38 = vector.shape_cast %37 : vector<1xf32> to vector<1x1x1xf32>
      %39 = vector.extract %38[0, 0, 0] : f32 from vector<1x1x1xf32>
      %cst_28 = arith.constant 1.000000e+00 : f32
      %40 = arith.addf %39, %cst_28 : f32
      %cst_29 = arith.constant 2.000000e+00 : f32
      %41 = arith.mulf %cst_29, %33 : f32
      %cst_30 = arith.constant 1.000000e+00 : f32
      %42 = arith.addf %41, %cst_30 : f32
      %43 = arith.divf %42, %40 : f32
      %cst_31 = arith.constant 1.000000e+00 : f32
      %44 = arith.subf %cst_31, %43 : f32
      %c0_32 = arith.constant 0 : index
      %45 = memref.load %arg4[%c0_32] : memref<1xf32, #tpu.memory_space<smem>>
      memref.store %44, %arg4[%c0_32] : memref<1xf32, #tpu.memory_space<smem>>
    } else {
    }
    return
  }
  func.func @transform_0(%arg0: i32, %arg1: i32) -> (i32, i32, i32, i32) {
    %c1_i32 = arith.constant 1 : i32
    %c0_i32 = arith.constant 0 : i32
    %c0_i32_0 = arith.constant 0 : i32
    return %arg0, %c1_i32, %arg1, %c0_i32 : i32, i32, i32, i32
  }
  func.func @transform_1(%arg0: i32, %arg1: i32) -> (i32, i32, i32) {
    %c0_i32 = arith.constant 0 : i32
    %c0_i32_0 = arith.constant 0 : i32
    return %arg0, %arg1, %c0_i32 : i32, i32, i32
  }
  func.func @transform_2(%arg0: i32, %arg1: i32) -> i32 {
    %c0_i32 = arith.constant 0 : i32
    %c0_i32_0 = arith.constant 0 : i32
    return %c0_i32 : i32
  }
}

</mosaic_0001>

<llo_original>
// kernel: tpu_custom_call.1
$region0: #{tpu_custom_call.1}
  #allocation0 [shape = 'u32[]', space=smem, size = 0x4, offset = 0x4, fixed_abs, tag = 'smem constant byte address 0x4 - core index']
  #allocation1 [shape = 'u32[144,128]{1,0:T(1,128)}', space=vmem, size = 0x12000, scoped, tag = 'internal scratch']
  #allocation2 [shape = 'f32[2,16,16]{2,1,0:T(8,128)}', space=vmem, size = 0x4000, scoped, tag = 'scratch operand']
  %s0 = inlined_call_operand.hbm [shape: f32[2,4,16,16], index: 0, kind: input, shape index: {}]
  %s1 = inlined_call_operand.hbm [shape: f32[2,16,16], index: 1, kind: input, shape index: {}]
  %s2 = inlined_call_operand.hbm [shape: f32[1], index: 2, kind: output, shape index: {}]
  %s3 = sld [smem:[#allocation0]]
  $region57: #{tpu_custom_call.1} parent=0
    _
  %s5 = ssub.s32 1, %s3
  %s6 = scalar_select 0, %s5, %s3
  $region1: #{tpu_custom_call.1} parent=0
    #allocation3 [shape = 'u8[16384]{0}', space=vmem, size = 0x4000, scoped, tag = 'input window, operand 0']
    #allocation4 [shape = 's32[2]{0}', space=sflag, size = 0x8, scoped, tag = 'scoped memory for tpu_custom_call.1']
    #allocation5 [shape = 's32[2]{0}', space=sflag, size = 0x8, scoped, tag = 'scoped memory for tpu_custom_call.1']
    #allocation6 [shape = 'u8[16384]{0}', space=vmem, size = 0x4000, scoped, tag = 'input window, operand 1']
    #allocation7 [shape = 's32[2]{0}', space=sflag, size = 0x8, scoped, tag = 'scoped memory for tpu_custom_call.1']
    #allocation8 [shape = 'u8[512]{0}', space=smem, size = 0x200, scoped, tag = 'output window, operand 0, single buffered']
    %7 = vsyncpa [#allocation4], 0
    %s8 = scalar_lea.sflag [#allocation4], 1
    %9 = vsyncpa %s8, 0
    %10 = vsyncpa [#allocation7], 0
    %s11 = scalar_lea.sflag [#allocation7], 1
    %12 = vsyncpa %s11, 0
    %13 = vsyncpa [#allocation5], 0
    loop: start=0, step=1, limit=4
    $region2: #{tpu_custom_call.1} parent=1 // loop_pre_header
      _
    $region3: #{tpu_custom_call.1} parent=1 // loop_header
      %s15 = sphi 0, %s19
      %p16 = scmp.ge.s32.totalorder %s15, 4
      %s22 = sphi 0, %s34
      %s23 = sphi 0, %s30
      %s24 = sphi 0, %s22
      %s25 = sphi 0, %s23
      %s26 = sphi 0, %s24
      %s27 = sphi 0, %s25
      %s39 = sphi 0, %s41
      %s42 = sphi 0, %s39
      %s43 = sphi 0, %s42
      %s59 = sphi 0, %s43
      %s67 = sphi 0, %s69
      %s70 = sphi 0, %s67
      %s71 = sphi 0, %s70
      %s87 = sphi 0, %s71
      %s91 = sphi 0, %s91
      %s93 = sphi 0, %s91
      %s94 = sphi 0, %s93
      %s108 = sphi 0, %s94
    $region4: #{tpu_custom_call.1} parent=1 // loop_header_branch
      %18 = sbr.rel (%p16) target = $region8
    $region5: #{tpu_custom_call.1} parent=1 // loop_body
      %s20 = ssub.s32 %s15, 1
      %s21 = ssub.s32 %s15, 2
      %s28 = sadd.s32 1, %s23
      %p29 = scmp.ge.s32.totalorder %s28, 1
      %s30 = scalar_select %p29, 0, %s28
      %s31 = sadd.s32 1, %s22
      %s32 = scalar_select %p29, %s31, %s22
      %p33 = scmp.ge.s32.totalorder %s32, 2
      %s34 = scalar_select %p33, 0, %s32
      %s35 = ssub.s32 %s22, %s34
      %s36 = ssub.s32 %s23, %s30
      %s37 = sor.u32 %s35, %s36
      %p38 = scmp.eq.s32.totalorder %s37, 0
      %s40 = sadd.s32 %s39, 1
      %s41 = scalar_select %p38, %s39, %s40
      %p44 = pneg %p38
      %p45 = scmp.eq.s32.totalorder %s15, 1
      %p46 = por %p44, %p45
      %p47 = scmp.ne.s32.totalorder %s39, %s42
      %p48 = scmp.eq.s32.totalorder %s15, 0
      %p49 = por %p47, %p48
      %p50 = scmp.ne.s32.totalorder %s39, %s42
      %p51 = scmp.eq.s32.totalorder %s20, 1
      %p52 = por %p50, %p51
      %p53 = scmp.ne.s32.totalorder %s42, %s43
      %p54 = scmp.eq.s32.totalorder %s20, 0
      %p55 = por %p53, %p54
      %p56 = scmp.ne.s32.totalorder %s42, %s43
      %p57 = scmp.eq.s32.totalorder %s21, 1
      %p58 = por %p56, %p57
      %p60 = scmp.ne.s32.totalorder %s43, %s59
      %p61 = scmp.eq.s32.totalorder %s21, 0
      %p62 = por %p60, %p61
      %s63 = ssub.s32 %s22, %s34
      %s64 = ssub.s32 %s23, %s30
      %s65 = sor.u32 %s63, %s64
      %p66 = scmp.eq.s32.totalorder %s65, 0
      %s68 = sadd.s32 %s67, 1
      %s69 = scalar_select %p66, %s67, %s68
      %p72 = pneg %p66
      %p73 = scmp.eq.s32.totalorder %s15, 1
      %p74 = por %p72, %p73
      %p75 = scmp.ne.s32.totalorder %s67, %s70
      %p76 = scmp.eq.s32.totalorder %s15, 0
      %p77 = por %p75, %p76
      %p78 = scmp.ne.s32.totalorder %s67, %s70
      %p79 = scmp.eq.s32.totalorder %s20, 1
      %p80 = por %p78, %p79
      %p81 = scmp.ne.s32.totalorder %s70, %s71
      %p82 = scmp.eq.s32.totalorder %s20, 0
      %p83 = por %p81, %p82
      %p84 = scmp.ne.s32.totalorder %s70, %s71
      %p85 = scmp.eq.s32.totalorder %s21, 1
      %p86 = por %p84, %p85
      %p88 = scmp.ne.s32.totalorder %s71, %s87
      %p89 = scmp.eq.s32.totalorder %s21, 0
      %p90 = por %p88, %p89
      %s92 = sadd.s32 %s91, 1
      %p95 = scmp.eq.s32.totalorder %s15, 1
      %p96 = scmp.ne.s32.totalorder %s91, %s93
      %p97 = scmp.eq.s32.totalorder %s15, 0
      %p98 = por %p96, %p97
      %p99 = scmp.ne.s32.totalorder %s91, %s93
      %p100 = scmp.eq.s32.totalorder %s20, 1
      %p101 = por %p99, %p100
      %p102 = scmp.ne.s32.totalorder %s93, %s94
      %p103 = scmp.eq.s32.totalorder %s20, 0
      %p104 = por %p102, %p103
      %p105 = scmp.ne.s32.totalorder %s93, %s94
      %p106 = scmp.eq.s32.totalorder %s21, 1
      %p107 = por %p105, %p106
      %p109 = scmp.ne.s32.totalorder %s94, %s108
      %p110 = scmp.eq.s32.totalorder %s21, 0
      %p111 = por %p109, %p110
      %p112 = scmp.le.s32.totalorder 1, %s15
      %p113 = scmp.lt.s32.totalorder %s15, 3
      %p114 = pnand %p112, %p113
      %p115 = pneg %p114
      // Predicated region
      $region9: #{tpu_custom_call.1} parent=5 // pred_check
        _
      $region10: #{tpu_custom_call.1} parent=5 // pred_check_branch
        %117 = sbr.rel (%p114) target = $region12
      $region11: #{tpu_custom_call.1} parent=5 // pred_region
        %s118 = ssub.s32 %s15, 1
      $region12: #{tpu_custom_call.1} parent=5 // pred_fallthru
        _
      %p119 = scmp.lt.s32.totalorder %s15, 2
      // Predicated region
      $region13: #{tpu_custom_call.1} parent=5 // pred_check
        %p120 = pneg %p119
      $region14: #{tpu_custom_call.1} parent=5 // pred_check_branch
        %122 = sbr.rel (%p120) target = $region16
      $region15: #{tpu_custom_call.1} parent=5 // pred_region
        // Predicated region
        $region17: #{tpu_custom_call.1} parent=15 // pred_check
          %p123 = pneg %p49
        $region18: #{tpu_custom_call.1} parent=15 // pred_check_branch
          %125 = sbr.rel (%p123) target = $region20
        $region19: #{tpu_custom_call.1} parent=15 // pred_region
          %s126 = sand.u32 %s39, 1
          %s127 = scalar_lea.sflag [#allocation4], %s126
          %s128 = sand.u32 %s39, 1
          %s129 = smul.addr %s128, 16
          %s130 = scalar_lea.vmem [#allocation3], %s129
          %s131 = smul.u32 2, %s23
          %s133 = ssub.s32 256, 256
          %134 = vsyncadd %s127, %s133
          %s135 = sadd.s32 %s131, 2
          %s136 = smul.addr %s22, 8
          %s137 = sadd.s32 %s135, %s136
          %s138 = smul.addr %s137, 128
          %s139 = scalar_lea.hbm %s0, %s138
          %s140 = sshll.u32 %s130, 4
          %s141 = int_to_ptr.vmem [resolvable:$true] %s140
          %146 = dma.hbm_to_vmem [thread:$0]  %s139, 256, %s141, %s127, 128, 128, 8
        $region20: #{tpu_custom_call.1} parent=15 // pred_fallthru
          _
        // Predicated region
        $region21: #{tpu_custom_call.1} parent=15 // pred_check
          %p147 = pneg %p77
        $region22: #{tpu_custom_call.1} parent=15 // pred_check_branch
          %149 = sbr.rel (%p147) target = $region24
        $region23: #{tpu_custom_call.1} parent=15 // pred_region
          %s150 = sand.u32 %s67, 1
          %s151 = scalar_lea.sflag [#allocation7], %s150
          %s152 = sand.u32 %s67, 1
          %s153 = smul.addr %s152, 16
          %s154 = scalar_lea.vmem [#allocation6], %s153
          %s155 = smul.u32 2, %s23
          %s157 = ssub.s32 256, 256
          %158 = vsyncadd %s151, %s157
          %s159 = smul.addr %s22, 2
          %s160 = sadd.s32 %s155, %s159
          %s161 = smul.addr %s160, 128
          %s162 = scalar_lea.hbm %s1, %s161
          %s163 = sshll.u32 %s154, 4
          %s164 = int_to_ptr.vmem [resolvable:$true] %s163
          %169 = dma.hbm_to_vmem [thread:$0]  %s162, 256, %s164, %s151, 128, 128, 8
        $region24: #{tpu_custom_call.1} parent=15 // pred_fallthru
          _
      $region16: #{tpu_custom_call.1} parent=5 // pred_fallthru
        _
      %p170 = scmp.le.s32.totalorder 1, %s15
      %p171 = scmp.lt.s32.totalorder %s15, 3
      %p172 = pnand %p170, %p171
      %p173 = pneg %p172
      // Predicated region
      $region25: #{tpu_custom_call.1} parent=5 // pred_check
        _
      $region26: #{tpu_custom_call.1} parent=5 // pred_check_branch
        %175 = sbr.rel (%p172) target = $region28
      $region27: #{tpu_custom_call.1} parent=5 // pred_region
        %s176 = ssub.s32 %s15, 1
        %s177 = sand.u32 %s42, 1
        %s178 = scalar_lea.sflag [#allocation4], %s177
        %s179 = sand.u32 %s42, 1
        %s180 = smul.addr %s179, 16
        %s181 = scalar_lea.vmem [#allocation3], %s180
        // Predicated region
        $region29: #{tpu_custom_call.1} parent=27 // pred_check
          %p182 = pneg %p55
        $region30: #{tpu_custom_call.1} parent=27 // pred_check_branch
          %184 = sbr.rel (%p182) target = $region32
        $region31: #{tpu_custom_call.1} parent=27 // pred_region
          %185 = dma.done %s178, 256
        $region32: #{tpu_custom_call.1} parent=27 // pred_fallthru
          _
        %s186 = sand.u32 %s70, 1
        %s187 = scalar_lea.sflag [#allocation7], %s186
        %s188 = sand.u32 %s70, 1
        %s189 = smul.addr %s188, 16
        %s190 = scalar_lea.vmem [#allocation6], %s189
        // Predicated region
        $region33: #{tpu_custom_call.1} parent=27 // pred_check
          %p191 = pneg %p83
        $region34: #{tpu_custom_call.1} parent=27 // pred_check_branch
          %193 = sbr.rel (%p191) target = $region36
        $region35: #{tpu_custom_call.1} parent=27 // pred_region
          %194 = dma.done %s187, 256
        $region36: #{tpu_custom_call.1} parent=27 // pred_fallthru
          _
        %s195 = sand.u32 %s42, 1
        %s196 = scalar_lea.sflag [#allocation4], %s195
        %s197 = sand.u32 %s42, 1
        %s198 = smul.addr %s197, 16
        %s199 = scalar_lea.vmem [#allocation3], %s198
        %p200 = pneg %p55
        %p201 = pneg %p52
        %s202 = sand.u32 %s70, 1
        %s203 = scalar_lea.sflag [#allocation7], %s202
        %s204 = sand.u32 %s70, 1
        %s205 = smul.addr %s204, 16
        %s206 = scalar_lea.vmem [#allocation6], %s205
        %p207 = pneg %p83
        %p208 = pneg %p80
        %p209 = pneg %p104
        %p210 = pneg %p101
        %s211 = smul.u32 2, %s25
        %s212 = smul.u32 2, %s25
        %p213 = scmp.eq.s32.totalorder %s24, 0
        %p214 = scmp.eq.s32.totalorder %s25, 0
        %p215 = pnand %p213, %p214
        %p216 = pneg %p215
        %p217 = scmp.eq.s32.totalorder %s24, 1
        %p218 = pnand %p217, %p214
        %p219 = pneg %p218
        // Predicated region
        $region37: #{tpu_custom_call.1} parent=27 // pred_check
          _
        $region38: #{tpu_custom_call.1} parent=27 // pred_check_branch
          %221 = sbr.rel (%p215) target = $region40
        $region39: #{tpu_custom_call.1} parent=27 // pred_region
          %vm222 = vcmask 130048
          %223 = vst.msk [vmem:[#allocation2] sm:$0xff] %vm222, 0.0
          %224 = vst.msk [vmem:[#allocation2 + $0x8] sm:$0xff] %vm222, 0.0
          %225 = vst.msk [vmem:[#allocation2 + $0x10] sm:$0xff] %vm222, 0.0
          %226 = vst.msk [vmem:[#allocation2 + $0x18] sm:$0xff] %vm222, 0.0
        $region40: #{tpu_custom_call.1} parent=27 // pred_fallthru
          _
        %v227 = vld [vmem:[%s181] sm:$0xff]
        %v228 = vld [vmem:[%s181 + $0x8] sm:$0xff]
        %v229 = vld [vmem:[%s190] sm:$0xff]
        %v230 = vld [vmem:[%s190 + $0x8] sm:$0xff]
        %v231 = vld [vmem:[#allocation2] sm:$0xff]
        %v232 = vld [vmem:[#allocation2 + $0x8] sm:$0xff]
        %v233 = vmul.f32 %v227, %v229
        %v234 = vmul.f32 %v228, %v230
        %v235 = vadd.f32 %v231, %v233
        %v236 = vadd.f32 %v232, %v234
        %vm237 = vcmask 130048
        %238 = vst.msk [vmem:[#allocation2] sm:$0xff] %vm237, %v235
        %239 = vst.msk [vmem:[#allocation2 + $0x8] sm:$0xff] %vm237, %v236
        %s240 = scalar_lea.vmem [#allocation2], 16
        %v241 = vld [vmem:[%s240] sm:$0xff]
        %v242 = vld [vmem:[%s240 + $0x8] sm:$0xff]
        %v243 = vadd.f32 %v227, %v229
        %v244 = vadd.f32 %v228, %v230
        %v245 = vadd.f32 %v241, %v243
        %v246 = vadd.f32 %v242, %v244
        %247 = vst.msk [vmem:[%s240] sm:$0xff] %vm237, %v245
        %248 = vst.msk [vmem:[%s240 + $0x8] sm:$0xff] %vm237, %v246
        // Predicated region
        $region41: #{tpu_custom_call.1} parent=27 // pred_check
          _
        $region42: #{tpu_custom_call.1} parent=27 // pred_check_branch
          %250 = sbr.rel (%p218) target = $region44
        $region43: #{tpu_custom_call.1} parent=27 // pred_region
          %v251 = vld [vmem:[#allocation2] sm:$0xff]
          %v252 = vld [vmem:[#allocation2 + $0x8] sm:$0xff]
          %v253 = vsel %vm237, %v251, 0.0
          %v254 = vsel %vm237, %v252, 0.0
          %v255 = vadd.f32 %v253, %v254
          %256 = vadd.xlane.f32.xlu0 %v255
          %v257 = vpop.xlane.xlu0 %256
          %v258 = vrot.slane %v257, 4
          %v259 = vadd.f32 %v257, %v258
          %v260 = vrot.slane %v259, 2
          %v261 = vadd.f32 %v259, %v260
          %v262 = vrot.slane %v261, 1
          %v263 = vadd.f32 %v261, %v262
          %s264 = vtos %v263
          %v265 = vld [vmem:[%s240] sm:$0xff]
          %v266 = vld [vmem:[%s240 + $0x8] sm:$0xff]
          %v267 = vsel %vm237, %v265, 0.0
          %v268 = vsel %vm237, %v266, 0.0
          %v269 = vadd.f32 %v267, %v268
          %270 = vadd.xlane.f32.xlu0 %v269
          %v271 = vpop.xlane.xlu0 %270
          %v272 = vrot.slane %v271, 4
          %v273 = vadd.f32 %v271, %v272
          %v274 = vrot.slane %v273, 2
          %v275 = vadd.f32 %v273, %v274
          %v276 = vrot.slane %v275, 1
          %v277 = vadd.f32 %v275, %v276
          %s278 = vtos %v277
          %s279 = sadd.f32 %s278, 1.0
          %s280 = smul.f32 %s264, 2.0
          %s281 = sadd.f32 %s280, 1.0
          %v282 = vstv %s279
          %v283 = vrcp.pop %v282
          %s284 = vtos %v283
          %s285 = smul.f32 %s281, %s284
          %s286 = ssub.f32 1.0, %s285
          %s287 = scalar_lea.smem [#allocation8], 0
          %288 = sst [smem:[%s287]] %s286
        $region44: #{tpu_custom_call.1} parent=27 // pred_fallthru
          _
        // Predicated region
        $region45: #{tpu_custom_call.1} parent=27 // pred_check
          %p289 = pneg %p101
        $region46: #{tpu_custom_call.1} parent=27 // pred_check_branch
          %291 = sbr.rel (%p289) target = $region48
        $region47: #{tpu_custom_call.1} parent=27 // pred_region
          %s293 = ssub.s32 16, 16
          %294 = vsyncadd [#allocation5], %s293
          %297 = dma.smem_to_hbm [#allocation8], 16, %s2, [#allocation5]
        $region48: #{tpu_custom_call.1} parent=27 // pred_fallthru
          _
        // Predicated region
        $region49: #{tpu_custom_call.1} parent=27 // pred_check
          %p298 = pneg %p101
        $region50: #{tpu_custom_call.1} parent=27 // pred_check_branch
          %300 = sbr.rel (%p298) target = $region52
        $region51: #{tpu_custom_call.1} parent=27 // pred_region
          %301 = dma.done [#allocation5], 16
        $region52: #{tpu_custom_call.1} parent=27 // pred_fallthru
          _
        %302 = sfence
      $region28: #{tpu_custom_call.1} parent=5 // pred_fallthru
        _
      %p303 = scmp.le.s32.totalorder 2, %s15
      // Predicated region
      $region53: #{tpu_custom_call.1} parent=5 // pred_check
        %p304 = pneg %p303
      $region54: #{tpu_custom_call.1} parent=5 // pred_check_branch
        %306 = sbr.rel (%p304) target = $region56
      $region55: #{tpu_custom_call.1} parent=5 // pred_region
        %s307 = ssub.s32 %s15, 2
      $region56: #{tpu_custom_call.1} parent=5 // pred_fallthru
        _
    $region6: #{tpu_custom_call.1} parent=1 // loop_footer
      %s19 = sadd.s32 1, %s15
    $region7: #{tpu_custom_call.1} parent=1 // loop_footer_branch
      %14 = sbr.rel target = $region3
    $region8: #{tpu_custom_call.1} parent=1 // loop_exit
      _
    %308 = vsyncpa [#allocation4], 1
    %s309 = scalar_lea.sflag [#allocation4], 1
    %310 = vsyncpa %s309, 1
    %311 = vsyncpa [#allocation7], 1
    %s312 = scalar_lea.sflag [#allocation7], 1
    %313 = vsyncpa %s312, 1
    %314 = vsyncpa [#allocation5], 1
    %s315 = scalar_lea.sflag [#allocation5], 1
    %316 = vsyncpa %s315, 1

</llo_original>
